<compile_context>
chip_gen: v6e
topology: v6e:2x2x1
jax: 0.10.0
libtpu: 0.0.40
codegen_flags: <defaults>
</compile_context>

<pallas_src>
import functools
import math

import jax
import jax.numpy as jnp
from jax.experimental import pallas as pl
from jax.experimental.pallas import tpu as pltpu

_GOLDEN = 0x9E3779B9
_TARGET_BLOCK_BYTES = 2 * 1024 * 1024    # per-block footprint target (all gens)
_MIN_BLOCKS_LARGE = 4                    # >= 4 grid steps for slabs > 1 MiB (v7x)
_IH4_MEAN = 4 * 255.0 / 2.0                                 # 510
_IH4_STD = math.sqrt(4.0 * (256.0 ** 2 - 1.0) / 12.0)       # ~147.797


def _gaussian_noise_kernel(seed_ref, x_ref, o_ref, *, sigma):
    tile_r, lanes = x_ref.shape
    shift = lanes.bit_length() - 1       # lanes is a power of two (128/256/512)

    # Unique 32-bit counter per element of the global flattened array so every
    # grid step draws an independent noise tile (results independent of the
    # tiling).  NOTE: counters wrap for tensors with > 2**32 elements.
    row = jax.lax.broadcasted_iota(jnp.int32, (tile_r, lanes), 0)
    col = jax.lax.broadcasted_iota(jnp.int32, (tile_r, lanes), 1)
    local = ((row << shift) | col).astype(jnp.uint32)        # row*lanes + col
    base = (pl.program_id(0).astype(jnp.uint32) * jnp.uint32(tile_r * lanes)
            + seed_ref[0].astype(jnp.uint32) * jnp.uint32(_GOLDEN))
    h = local + base                                          # scalar broadcast

    # One round of lowbias32 (full-avalanche hash for sequential counters).
    h = h ^ (h >> 16)
    h = h * jnp.uint32(0x7FEB352D)
    h = h ^ (h >> 15)
    h = h * jnp.uint32(0x846CA68B)
    h = h ^ (h >> 16)

    # Irwin-Hall(4) approximate standard normal: sum of the four hash bytes,
    # centred/scaled (exact mean 0 / std 1, tails bounded at ~±3.45 sigma).
    s = ((h & jnp.uint32(0xFF)) + ((h >> 8) & jnp.uint32(0xFF))
         + ((h >> 16) & jnp.uint32(0xFF)) + (h >> 24))
    sf = s.astype(jnp.int32).astype(jnp.float32)

    # out = x * (1 + sigma * noise), noise = (sf - mean)/std, folded into one
    # FMA: factor = a*sf + c.
    a = jnp.float32(sigma / _IH4_STD)
    c = jnp.float32(1.0 - sigma * _IH4_MEAN / _IH4_STD)
    factor = a * sf + c
    # Final multiply in the native dtype (bf16 runs 2x packed on v6e/v7x).
    o_ref[...] = x_ref[...] * factor.astype(o_ref.dtype)


def _plan(total, itemsize):
    """Choose (lanes, rows, pad_elems, tile_rows) for a lane-dense slab."""
    sub = max(8, 32 // itemsize)         # sublane multiple for this dtype

    lanes = rows = None
    # 1) Prefer a lane width that divides the element count (no host pad) with
    #    sublane-aligned rows (tileable).
    for cand in (512, 256, 128):
        if total % cand == 0 and (total // cand) % sub == 0:
            lanes, rows = cand, total // cand
            break
    if lanes is None:
        # 2) No-pad layout whose rows aren't sublane aligned is still fine as a
        #    single full-array block (block_shape == full dims is allowed).
        for cand in (512, 256, 128):
            if total % cand == 0 and total * itemsize <= _TARGET_BLOCK_BYTES:
                return cand, total // cand, 0, total // cand
    if lanes is None:
        # 3) Fallback: pad the tail (extra HBM round trip outside the kernel;
        #    only hit when no 128-multiple lane width divides the size).
        lanes = 512
        rows = -(-total // lanes)
        rows = -(-rows // sub) * sub

    pad = rows * lanes - total

    # Block rows: ~2 MiB per block (double-buffered in+out = 8 MiB, safe in
    # v5e's 16 MiB scoped-VMEM default), sublane aligned.
    max_rows = max(sub, (_TARGET_BLOCK_BYTES // (lanes * itemsize)) // sub * sub)
    tile_rows = min(rows, max_rows)
    # v7x megacore: keep >= _MIN_BLOCKS_LARGE grid steps for slabs > 1 MiB so
    # the "parallel" axis has work for both TensorCores.
    if rows * lanes * itemsize > (1 << 20):
        while tile_rows > sub and -(-rows // tile_rows) < _MIN_BLOCKS_LARGE:
            tile_rows = max(sub, (tile_rows // 2) // sub * sub)
    return lanes, rows, pad, tile_rows


def gaussian_noise(x, seed, *, sigma=0.1, training=True,
                   is_relative_detach=False):
    """Forward pass of GaussianNoise.

    is_relative_detach only changes which tensor gradients flow through in
    PyTorch (x.detach() vs x); forward values are identical, so it is a no-op
    for this forward-only kernel.
    """
    del is_relative_detach
    if (not training) or sigma == 0.0:
        return x

    orig_shape = x.shape
    total = int(x.size)
    itemsize = jnp.dtype(x.dtype).itemsize
    lanes, rows, pad, tile_rows = _plan(total, itemsize)

    xf = x.reshape(-1)
    if pad:
        xf = jnp.pad(xf, (0, pad))
    x2 = xf.reshape(rows, lanes)

    num_blocks = -(-rows // tile_rows)
    seed_arr = jnp.asarray([seed], dtype=jnp.int32)
    kernel = functools.partial(_gaussian_noise_kernel, sigma=float(sigma))

    out = pl.pallas_call(
        kernel,
        out_shape=jax.ShapeDtypeStruct((rows, lanes), x.dtype),
        grid_spec=pltpu.PrefetchScalarGridSpec(
            num_scalar_prefetch=1,                          # seed -> SMEM
            grid=(num_blocks,),
            in_specs=[pl.BlockSpec((tile_rows, lanes), lambda i, s: (i, 0))],
            out_specs=pl.BlockSpec((tile_rows, lanes), lambda i, s: (i, 0)),
        ),
        compiler_params=pltpu.CompilerParams(
            dimension_semantics=("parallel",)),             # shard across v7x TCs
        # Operand 1 = x2 (after the scalar-prefetch seed at index 0) may reuse
        # the output HBM buffer -> lower peak footprint, no defensive copy
        # when the caller donates x inside a jitted training graph.
        input_output_aliases={1: 0},
        # Mem-bound elementwise op: advertise traffic so XLA can overlap it
        # with neighbouring compute-bound ops (RRDB convs).
        cost_estimate=pl.CostEstimate(
            flops=30 * rows * lanes,
            transcendentals=0,
            bytes_accessed=2 * rows * lanes * itemsize),
    )(seed_arr, x2)

    out_flat = out.reshape(-1)
    if pad:
        out_flat = out_flat[:total]
    return out_flat.reshape(orig_shape)


if __name__ == "__main__":
    key = jax.random.PRNGKey(0)
    x = jax.random.normal(key, (2, 4, 16, 16), dtype=jnp.float32)

    # Training-mode forward: x + sigma * x * noise,  noise ~ approx N(0, 1).
    y = gaussian_noise(x, seed=123, sigma=0.1, training=True,
                       is_relative_detach=False)
    y = jax.block_until_ready(y)
    assert y.shape == x.shape and y.dtype == x.dtype
    assert bool(jnp.all(jnp.isfinite(y)))
    assert bool(jnp.any(y != x))          # noise actually applied

    # Implied noise z = (y/x - 1)/sigma should have mean ~0 and std ~1.
    z = (y / x - 1.0) / 0.1
    m = float(jnp.mean(z))
    s = float(jnp.std(z))
    assert abs(m) < 0.2, m
    assert 0.7 < s < 1.3, s
    assert float(jnp.max(jnp.abs(z))) < 4.0   # bounded Irwin-Hall(4) tails

    # Different seeds -> different noise realizations.
    y2 = gaussian_noise(x, seed=7, sigma=0.1, training=True)
    assert bool(jnp.any(y2 != y))

    # Eval-mode forward: identity.
    y_eval = gaussian_noise(x, seed=123, sigma=0.1, training=False)
    y_eval = jax.block_until_ready(y_eval)
    assert bool(jnp.all(y_eval == x))

    print("KERNEL_OK")
</pallas_src>

<mosaic_0001>
module attributes {stable_mosaic.version = 11 : i64} {
  func.func @_gaussian_noise_kernel(%arg0: i32, %arg1: memref<1xi32, #tpu.memory_space<smem>>, %arg2: memref<8x256xf32, #tpu.memory_space<vmem>>, %arg3: memref<8x256xf32, #tpu.memory_space<vmem>>) attributes {dimension_semantics = [#tpu.dimension_semantics<parallel>], iteration_bounds = array<i64: 1>, scalar_prefetch = 1 : i64, scratch_operands = 0 : i64, tpu.core_type = #tpu.core_type<tc>, window_params = [{transform_indices = @transform_0, window_bounds = array<i64: 8, 256>}, {transform_indices = @transform_1, window_bounds = array<i64: 8, 256>}]} {
    %0 = tpu.iota {dimensions = array<i32: 0>} : vector<8x256xi32>
    %1 = tpu.iota {dimensions = array<i32: 1>} : vector<8x256xi32>
    %c8_i32 = arith.constant 8 : i32
    %2 = vector.broadcast %c8_i32 : i32 to vector<8x256xi32>
    %3 = arith.shli %0, %2 : vector<8x256xi32>
    %4 = arith.ori %3, %1 : vector<8x256xi32>
    %c2048_i32 = arith.constant 2048 : i32
    %5 = arith.muli %arg0, %c2048_i32 : i32
    %c0 = arith.constant 0 : index
    %6 = memref.load %arg1[%c0] : memref<1xi32, #tpu.memory_space<smem>>
    %c-1640531527_i32 = arith.constant -1640531527 : i32
    %7 = arith.muli %6, %c-1640531527_i32 : i32
    %8 = arith.addi %5, %7 : i32
    %9 = vector.broadcast %8 : i32 to vector<8x256xi32>
    %10 = arith.addi %4, %9 : vector<8x256xi32>
    %c16_i32 = arith.constant 16 : i32
    %11 = vector.broadcast %c16_i32 : i32 to vector<8x256xi32>
    %12 = arith.shrui %10, %11 : vector<8x256xi32>
    %13 = arith.xori %10, %12 : vector<8x256xi32>
    %c2146121005_i32 = arith.constant 2146121005 : i32
    %14 = vector.broadcast %c2146121005_i32 : i32 to vector<8x256xi32>
    %15 = arith.muli %13, %14 : vector<8x256xi32>
    %c15_i32 = arith.constant 15 : i32
    %16 = vector.broadcast %c15_i32 : i32 to vector<8x256xi32>
    %17 = arith.shrui %15, %16 : vector<8x256xi32>
    %18 = arith.xori %15, %17 : vector<8x256xi32>
    %c-2073254261_i32 = arith.constant -2073254261 : i32
    %19 = vector.broadcast %c-2073254261_i32 : i32 to vector<8x256xi32>
    %20 = arith.muli %18, %19 : vector<8x256xi32>
    %c16_i32_0 = arith.constant 16 : i32
    %21 = vector.broadcast %c16_i32_0 : i32 to vector<8x256xi32>
    %22 = arith.shrui %20, %21 : vector<8x256xi32>
    %23 = arith.xori %20, %22 : vector<8x256xi32>
    %c255_i32 = arith.constant 255 : i32
    %24 = vector.broadcast %c255_i32 : i32 to vector<8x256xi32>
    %25 = arith.andi %23, %24 : vector<8x256xi32>
    %c8_i32_1 = arith.constant 8 : i32
    %26 = vector.broadcast %c8_i32_1 : i32 to vector<8x256xi32>
    %27 = arith.shrui %23, %26 : vector<8x256xi32>
    %c255_i32_2 = arith.constant 255 : i32
    %28 = vector.broadcast %c255_i32_2 : i32 to vector<8x256xi32>
    %29 = arith.andi %27, %28 : vector<8x256xi32>
    %30 = arith.addi %25, %29 : vector<8x256xi32>
    %c16_i32_3 = arith.constant 16 : i32
    %31 = vector.broadcast %c16_i32_3 : i32 to vector<8x256xi32>
    %32 = arith.shrui %23, %31 : vector<8x256xi32>
    %c255_i32_4 = arith.constant 255 : i32
    %33 = vector.broadcast %c255_i32_4 : i32 to vector<8x256xi32>
    %34 = arith.andi %32, %33 : vector<8x256xi32>
    %35 = arith.addi %30, %34 : vector<8x256xi32>
    %c24_i32 = arith.constant 24 : i32
    %36 = vector.broadcast %c24_i32 : i32 to vector<8x256xi32>
    %37 = arith.shrui %23, %36 : vector<8x256xi32>
    %38 = arith.addi %35, %37 : vector<8x256xi32>
    %39 = arith.sitofp %38 : vector<8x256xi32> to vector<8x256xf32>
    %cst = arith.constant 6.76587515E-4 : f32
    %40 = vector.broadcast %cst : f32 to vector<8x256xf32>
    %41 = arith.mulf %40, %39 : vector<8x256xf32>
    %cst_5 = arith.constant 0.654940367 : f32
    %42 = vector.broadcast %cst_5 : f32 to vector<8x256xf32>
    %43 = arith.addf %41, %42 : vector<8x256xf32>
    %c0_6 = arith.constant 0 : index
    %c0_7 = arith.constant 0 : index
    %44 = vector.load %arg2[%c0_6, %c0_7] : memref<8x256xf32, #tpu.memory_space<vmem>>, vector<8x256xf32>
    %45 = arith.mulf %44, %43 : vector<8x256xf32>
    %c0_8 = arith.constant 0 : index
    %c0_9 = arith.constant 0 : index
    %46 = vector.load %arg3[%c0_8, %c0_9] : memref<8x256xf32, #tpu.memory_space<vmem>>, vector<8x256xf32>
    tpu.vector_store %arg3[%c0_8, %c0_9], %45 {strides = array<i32>} : memref<8x256xf32, #tpu.memory_space<vmem>>, vector<8x256xf32>,
    return
  }
  func.func @transform_0(%arg0: i32, %arg1: memref<1xi32, #tpu.memory_space<smem>>) -> (i32, i32) {
    %c0_i32 = arith.constant 0 : i32
    %c0_i32_0 = arith.constant 0 : i32
    return %arg0, %c0_i32 : i32, i32
  }
  func.func @transform_1(%arg0: i32, %arg1: memref<1xi32, #tpu.memory_space<smem>>) -> (i32, i32) {
    %c0_i32 = arith.constant 0 : i32
    %c0_i32_0 = arith.constant 0 : i32
    return %arg0, %c0_i32 : i32, i32
  }
}

</mosaic_0001>

<llo_original>
// kernel: tpu_custom_call.1
$region0: #{tpu_custom_call.1}
  #allocation0 [shape = 'u32[]', space=smem, size = 0x4, offset = 0x4, fixed_abs, tag = 'smem constant byte address 0x4 - core index']
  #allocation1 [shape = 'u32[144,128]{1,0:T(1,128)}', space=vmem, size = 0x12000, scoped, tag = 'internal scratch']
  #allocation2 [shape = 's32[1]{0}', space=sflag, size = 0x4, scoped, tag = 'scoped memory for tpu_custom_call.1']
  #allocation3 [shape = 's32[1]{0:T(128)S(6)}', space=smem, size = 0x200, scoped, tag = 'prefetched SMEM operand 0']
  %s0 = inlined_call_operand.<no memory space> [shape: s32[1], index: 0, kind: input, shape index: {}]
  %s1 = inlined_call_operand.hbm [shape: f32[8,256], index: 1, kind: input, shape index: {}, may-alias: {1,2}]
  %s2 = inlined_call_operand.hbm [shape: f32[8,256], index: 2, kind: output, shape index: {}, may-alias: {1,2}]
  %s3 = sld [smem:[#allocation0]]
  $region18: #{tpu_custom_call.1} parent=0
    _
  %s5 = ssub.s32 1, %s3
  %s6 = scalar_select 0, %s5, %s3
  %7 = sst [smem:[#allocation3]] %s0
  $region1: #{tpu_custom_call.1} parent=0
    #allocation4 [shape = 'u8[8192]{0}', space=vmem, size = 0x2000, scoped, tag = 'input window, operand 1, single buffered']
    #allocation5 [shape = 's32[1]{0}', space=sflag, size = 0x4, scoped, tag = 'scoped memory for tpu_custom_call.1']
    #allocation6 [shape = 's32[1]{0}', space=sflag, size = 0x4, scoped, tag = 'scoped memory for tpu_custom_call.1']
    #allocation7 [shape = 'u8[8192]{0}', space=vmem, size = 0x2000, scoped, tag = 'output window, operand 0, single buffered']
    %8 = vsyncpa [#allocation5], 0
    %9 = vsyncpa [#allocation6], 0
    // Predicated region
    $region2: #{tpu_custom_call.1} parent=1 // pred_check
      _
    $region3: #{tpu_custom_call.1} parent=1 // pred_check_branch
      %11 = sbr.rel (0) target = $region5
    $region4: #{tpu_custom_call.1} parent=1 // pred_region
      %s13 = ssub.s32 256, 256
      %14 = vsyncadd [#allocation5], %s13
      %s16 = sshll.u32 [#allocation4], 4
      %s17 = int_to_ptr.vmem [resolvable:$true] %s16
      %19 = dma.hbm_to_vmem [thread:$0]  %s1, 256, %s17, [#allocation5]
    $region5: #{tpu_custom_call.1} parent=1 // pred_fallthru
      _
    // Predicated region
    $region6: #{tpu_custom_call.1} parent=1 // pred_check
      _
    $region7: #{tpu_custom_call.1} parent=1 // pred_check_branch
      %21 = sbr.rel (0) target = $region9
    $region8: #{tpu_custom_call.1} parent=1 // pred_region
      %22 = dma.done [#allocation5], 256
    $region9: #{tpu_custom_call.1} parent=1 // pred_fallthru
      _
    %v23 = vlaneseq
    %v24 = vshrl.u32 %v23, 7
    %v25 = vlaneseq
    %v26 = vand.u32 %v25, 127
    %v27 = vadd.s32 %v26, 128
    %v28 = vshll.u32 %v24, 8
    %v29 = vor.u32 %v28, %v26
    %v30 = vor.u32 %v28, %v27
    %s31 = smul.u32 0, 2048
    %s32 = sld [smem:[#allocation3]]
    %s33 = smul.u32 %s32, 2654435769
    %s34 = sadd.s32 %s31, %s33
    %v35 = vstv %s34
    %v36 = vadd.s32 %v29, %v35
    %v37 = vadd.s32 %v30, %v35
    %v38 = vshrl.u32 %v36, 16
    %v39 = vshrl.u32 %v37, 16
    %v40 = vxor.u32 %v36, %v38
    %v41 = vxor.u32 %v37, %v39
    %v42 = vmul.u32 %v40, 2146121005
    %v43 = vmul.u32 %v41, 2146121005
    %v44 = vshrl.u32 %v42, 15
    %v45 = vshrl.u32 %v43, 15
    %v46 = vxor.u32 %v42, %v44
    %v47 = vxor.u32 %v43, %v45
    %v48 = vmul.u32 %v46, 2221713035
    %v49 = vmul.u32 %v47, 2221713035
    %v50 = vshrl.u32 %v48, 16
    %v51 = vshrl.u32 %v49, 16
    %v52 = vxor.u32 %v48, %v50
    %v53 = vxor.u32 %v49, %v51
    %v54 = vand.u32 %v52, 255
    %v55 = vand.u32 %v53, 255
    %v56 = vshrl.u32 %v52, 8
    %v57 = vshrl.u32 %v53, 8
    %v58 = vand.u32 %v56, 255
    %v59 = vand.u32 %v57, 255
    %v60 = vadd.s32 %v54, %v58
    %v61 = vadd.s32 %v55, %v59
    %v62 = vshrl.u32 %v52, 16
    %v63 = vshrl.u32 %v53, 16
    %v64 = vand.u32 %v62, 255
    %v65 = vand.u32 %v63, 255
    %v66 = vadd.s32 %v60, %v64
    %v67 = vadd.s32 %v61, %v65
    %v68 = vshrl.u32 %v52, 24
    %v69 = vshrl.u32 %v53, 24
    %v70 = vadd.s32 %v66, %v68
    %v71 = vadd.s32 %v67, %v69
    %v72 = vcvt.s32.f32 %v70
    %v73 = vcvt.s32.f32 %v71
    %v74 = vmul.f32 %v72, 0.0006765875
    %v75 = vmul.f32 %v73, 0.0006765875
    %v76 = vadd.f32 %v74, 0.65494037
    %v77 = vadd.f32 %v75, 0.65494037
    %v78 = vld [vmem:[#allocation4] sm:$0xff]
    %v79 = vld [vmem:[#allocation4 + $0x8] sm:$0xff]
    %v80 = vmul.f32 %v78, %v76
    %v81 = vmul.f32 %v79, %v77
    %82 = vst [vmem:[#allocation7] sm:$0xff] %v80
    %83 = vst [vmem:[#allocation7 + $0x8] sm:$0xff] %v81
    // Predicated region
    $region10: #{tpu_custom_call.1} parent=1 // pred_check
      _
    $region11: #{tpu_custom_call.1} parent=1 // pred_check_branch
      %85 = sbr.rel (0) target = $region13
    $region12: #{tpu_custom_call.1} parent=1 // pred_region
      %s87 = ssub.s32 256, 256
      %88 = vsyncadd [#allocation6], %s87
      %s90 = sshll.u32 [#allocation7], 4
      %s91 = int_to_ptr.vmem [resolvable:$true] %s90
      %93 = dma.vmem_to_hbm [thread:$0]  %s91, 256, %s2, [#allocation6]
    $region13: #{tpu_custom_call.1} parent=1 // pred_fallthru
      _
    // Predicated region
    $region14: #{tpu_custom_call.1} parent=1 // pred_check
      _
    $region15: #{tpu_custom_call.1} parent=1 // pred_check_branch
      %95 = sbr.rel (0) target = $region17
    $region16: #{tpu_custom_call.1} parent=1 // pred_region
      %96 = dma.done [#allocation6], 256
    $region17: #{tpu_custom_call.1} parent=1 // pred_fallthru
      _
    %97 = vsyncpa [#allocation5], 1
    %98 = vsyncpa [#allocation6], 1

</llo_original>
